<compile_context>
chip_gen: v5e
topology: v5e:2x2
jax: 0.10.0
libtpu: 0.0.40
codegen_flags: <defaults>
</compile_context>

<pallas_src>
import functools

import jax
import jax.numpy as jnp
from jax.experimental import pallas as pl
from jax.experimental.pallas import tpu as pltpu


def encoder_kernel(xi_ref, y_ref, p1_ref, p2_ref, out_ref, *, d_xi, d_y, hidden):
    xi = xi_ref[...]                                 # [tb, d_xi]
    y = y_ref[...]                                   # [tb, d_y]

    # Packed layer-1 params: rows [0:d_xi]=W1_xi, [d_xi:d_xi+d_y]=W1_y, last=b1.
    w1_xi = p1_ref[0:d_xi, :]                        # [d_xi, hidden]
    w1_y = p1_ref[d_xi:d_xi + d_y, :]                # [d_y,  hidden]
    b1 = p1_ref[d_xi + d_y:d_xi + d_y + 1, :]        # [1,    hidden]

    # Packed layer-2 params: rows [0:hidden]=W2, last=b2.
    w2 = p2_ref[0:hidden, :]                         # [hidden, enc]
    b2 = p2_ref[hidden:hidden + 1, :]                # [1,      enc]

    # linear1 as a split dot (no lane-axis concat) + bias + ReLU.
    h = jnp.dot(xi, w1_xi, preferred_element_type=jnp.float32)
    h = h + jnp.dot(y, w1_y, preferred_element_type=jnp.float32)
    h = jnp.maximum(h + b1, 0.0)

    # output_layer
    out = jnp.dot(h, w2, preferred_element_type=jnp.float32) + b2
    out_ref[...] = out.astype(out_ref.dtype)


def encoder_forward(xi, y, w1_t, b1, w2_t, b2, *, block_b=512):
    """xi: [B, d_xi], y: [B, d_y], w1_t: [d_xi+d_y, H], b1: [H] or [1, H],
    w2_t: [H, E], b2: [E] or [1, E]  ->  [B, E] float32."""
    batch, d_xi = xi.shape
    d_y = y.shape[1]
    hidden = w1_t.shape[1]
    enc = w2_t.shape[1]

    xi = xi.astype(jnp.float32)
    y = y.astype(jnp.float32)
    b1 = jnp.reshape(b1, (1, hidden)).astype(jnp.float32)
    b2 = jnp.reshape(b2, (1, enc)).astype(jnp.float32)
    # One packed constant operand per layer -> fewer DMA descriptors.
    p1 = jnp.concatenate([w1_t.astype(jnp.float32), b1], axis=0)   # [d_xi+d_y+1, H]
    p2 = jnp.concatenate([w2_t.astype(jnp.float32), b2], axis=0)   # [H+1, E]

    # Batch tile: multiple of 8 sublanes (or the full batch when it is smaller).
    if batch >= 8:
        tile_b = max(8, (min(block_b, batch) // 8) * 8)
    else:
        tile_b = batch
    padded = pl.cdiv(batch, tile_b) * tile_b
    if padded != batch:
        pad = padded - batch
        xi = jnp.pad(xi, ((0, pad), (0, 0)))
        y = jnp.pad(y, ((0, pad), (0, 0)))

    kernel = functools.partial(encoder_kernel, d_xi=d_xi, d_y=d_y, hidden=hidden)

    out = pl.pallas_call(
        kernel,
        out_shape=jax.ShapeDtypeStruct((padded, enc), jnp.float32),
        grid_spec=pltpu.PrefetchScalarGridSpec(
            num_scalar_prefetch=0,
            grid=(padded // tile_b,),
            in_specs=[
                pl.BlockSpec((tile_b, d_xi), lambda i: (i, 0)),
                pl.BlockSpec((tile_b, d_y), lambda i: (i, 0)),
                pl.BlockSpec(p1.shape, lambda i: (0, 0)),   # VMEM-resident params
                pl.BlockSpec(p2.shape, lambda i: (0, 0)),
            ],
            out_specs=pl.BlockSpec((tile_b, enc), lambda i: (i, 0)),
        ),
        compiler_params=pltpu.CompilerParams(
            dimension_semantics=("parallel",),
        ),
    )(xi, y, p1, p2)

    return out[:batch] if padded != batch else out


def init_linear_params(key, in_features, out_features):
    """Deterministic PyTorch-style Linear init: U(-1/sqrt(fan_in), 1/sqrt(fan_in))."""
    kw, kb = jax.random.split(key)
    bound = 1.0 / jnp.sqrt(jnp.float32(in_features))
    # Stored already transposed: [in_features, out_features]
    w_t = jax.random.uniform(kw, (in_features, out_features), jnp.float32,
                             minval=-bound, maxval=bound)
    b = jax.random.uniform(kb, (1, out_features), jnp.float32,
                           minval=-bound, maxval=bound)
    return w_t, b


if __name__ == "__main__":
    # Module hyper-parameters (design_dim is a tuple; design_dim[1] is the
    # per-step design feature dimension, as in the location-finding example).
    design_dim = (1, 4)
    observation_dim = 2
    hidden_dim = 32
    encoding_dim = 16
    batch = 32

    input_dim = design_dim[1] + observation_dim  # 6

    key = jax.random.PRNGKey(0)
    k_xi, k_y, k_l1, k_l2 = jax.random.split(key, 4)

    xi = jax.random.normal(k_xi, (batch, design_dim[1]), jnp.float32)
    y = jax.random.normal(k_y, (batch, observation_dim), jnp.float32)

    w1_t, b1 = init_linear_params(k_l1, input_dim, hidden_dim)
    w2_t, b2 = init_linear_params(k_l2, hidden_dim, encoding_dim)

    # Use a small batch tile so the demo exercises a multi-step, pipelined grid.
    out = encoder_forward(xi, y, w1_t, b1, w2_t, b2, block_b=8)
    out = jax.block_until_ready(out)

    # Pure-JAX reference check of the forward semantics.
    inputs = jnp.concatenate([xi, y], axis=-1)
    ref = jnp.maximum(inputs @ w1_t + b1, 0.0) @ w2_t + b2
    assert out.shape == (batch, encoding_dim)
    assert jnp.allclose(out, ref, atol=1e-5, rtol=1e-5)

    print("KERNEL_OK")
</pallas_src>

<mosaic_0001>
module attributes {stable_mosaic.version = 11 : i64} {
  func.func @encoder_kernel(%arg0: i32, %arg1: memref<8x4xf32, #tpu.memory_space<vmem>>, %arg2: memref<8x2xf32, #tpu.memory_space<vmem>>, %arg3: memref<7x32xf32, #tpu.memory_space<vmem>>, %arg4: memref<33x16xf32, #tpu.memory_space<vmem>>, %arg5: memref<8x16xf32, #tpu.memory_space<vmem>>) attributes {dimension_semantics = [#tpu.dimension_semantics<parallel>], iteration_bounds = array<i64: 4>, scalar_prefetch = 0 : i64, scratch_operands = 0 : i64, tpu.core_type = #tpu.core_type<tc>, window_params = [{transform_indices = @transform_0, window_bounds = array<i64: 8, 4>}, {transform_indices = @transform_1, window_bounds = array<i64: 8, 2>}, {pipeline_mode = #tpu.pipeline_mode<synchronous>, transform_indices = @transform_2, window_bounds = array<i64: 7, 32>}, {pipeline_mode = #tpu.pipeline_mode<synchronous>, transform_indices = @transform_3, window_bounds = array<i64: 33, 16>}, {transform_indices = @transform_4, window_bounds = array<i64: 8, 16>}]} {
    %c0 = arith.constant 0 : index
    %c0_0 = arith.constant 0 : index
    %0 = vector.load %arg1[%c0, %c0_0] : memref<8x4xf32, #tpu.memory_space<vmem>>, vector<8x4xf32>
    %c0_1 = arith.constant 0 : index
    %c0_2 = arith.constant 0 : index
    %1 = vector.load %arg2[%c0_1, %c0_2] : memref<8x2xf32, #tpu.memory_space<vmem>>, vector<8x2xf32>
    %c0_3 = arith.constant 0 : index
    %c0_4 = arith.constant 0 : index
    %2 = vector.load %arg3[%c0_3, %c0_4] : memref<7x32xf32, #tpu.memory_space<vmem>>, vector<4x32xf32>
    %c4 = arith.constant 4 : index
    %c0_5 = arith.constant 0 : index
    %3 = vector.load %arg3[%c4, %c0_5] : memref<7x32xf32, #tpu.memory_space<vmem>>, vector<2x32xf32>
    %c6 = arith.constant 6 : index
    %c0_6 = arith.constant 0 : index
    %4 = vector.load %arg3[%c6, %c0_6] : memref<7x32xf32, #tpu.memory_space<vmem>>, vector<1x32xf32>
    %c0_7 = arith.constant 0 : index
    %c0_8 = arith.constant 0 : index
    %5 = vector.load %arg4[%c0_7, %c0_8] : memref<33x16xf32, #tpu.memory_space<vmem>>, vector<32x16xf32>
    %c32 = arith.constant 32 : index
    %c0_9 = arith.constant 0 : index
    %6 = vector.load %arg4[%c32, %c0_9] : memref<33x16xf32, #tpu.memory_space<vmem>>, vector<1x16xf32>
    %cst = arith.constant dense<0.000000e+00> : vector<8x32xf32>
    %7 = tpu.matmul %0, %2, %cst {dimension_numbers = #tpu.dot_dimension_numbers<[1], [0], [0], [1], [0, 0, 1, 1], [], []>} : vector<8x4xf32>, vector<4x32xf32>, vector<8x32xf32> -> vector<8x32xf32>
    %cst_10 = arith.constant dense<0.000000e+00> : vector<8x32xf32>
    %8 = tpu.matmul %1, %3, %cst_10 {dimension_numbers = #tpu.dot_dimension_numbers<[1], [0], [0], [1], [0, 0, 1, 1], [], []>} : vector<8x2xf32>, vector<2x32xf32>, vector<8x32xf32> -> vector<8x32xf32>
    %9 = arith.addf %7, %8 : vector<8x32xf32>
    %10 = vector.broadcast %4 : vector<1x32xf32> to vector<8x32xf32>
    %11 = arith.addf %9, %10 : vector<8x32xf32>
    %cst_11 = arith.constant 0.000000e+00 : f32
    %12 = vector.broadcast %cst_11 : f32 to vector<8x32xf32>
    %13 = arith.maximumf %11, %12 : vector<8x32xf32>
    %cst_12 = arith.constant dense<0.000000e+00> : vector<8x16xf32>
    %14 = tpu.matmul %13, %5, %cst_12 {dimension_numbers = #tpu.dot_dimension_numbers<[1], [0], [0], [1], [0, 0, 1, 1], [], []>} : vector<8x32xf32>, vector<32x16xf32>, vector<8x16xf32> -> vector<8x16xf32>
    %15 = vector.broadcast %6 : vector<1x16xf32> to vector<8x16xf32>
    %16 = arith.addf %14, %15 : vector<8x16xf32>
    %c0_13 = arith.constant 0 : index
    %c0_14 = arith.constant 0 : index
    %17 = vector.load %arg5[%c0_13, %c0_14] : memref<8x16xf32, #tpu.memory_space<vmem>>, vector<8x16xf32>
    tpu.vector_store %arg5[%c0_13, %c0_14], %16 {strides = array<i32>} : memref<8x16xf32, #tpu.memory_space<vmem>>, vector<8x16xf32>,
    return
  }
  func.func @transform_0(%arg0: i32) -> (i32, i32) {
    %c0_i32 = arith.constant 0 : i32
    %c0_i32_0 = arith.constant 0 : i32
    return %arg0, %c0_i32 : i32, i32
  }
  func.func @transform_1(%arg0: i32) -> (i32, i32) {
    %c0_i32 = arith.constant 0 : i32
    %c0_i32_0 = arith.constant 0 : i32
    return %arg0, %c0_i32 : i32, i32
  }
  func.func @transform_2(%arg0: i32) -> (i32, i32) {
    %c0_i32 = arith.constant 0 : i32
    %c0_i32_0 = arith.constant 0 : i32
    %c0_i32_1 = arith.constant 0 : i32
    return %c0_i32, %c0_i32_0 : i32, i32
  }
  func.func @transform_3(%arg0: i32) -> (i32, i32) {
    %c0_i32 = arith.constant 0 : i32
    %c0_i32_0 = arith.constant 0 : i32
    %c0_i32_1 = arith.constant 0 : i32
    return %c0_i32, %c0_i32_0 : i32, i32
  }
  func.func @transform_4(%arg0: i32) -> (i32, i32) {
    %c0_i32 = arith.constant 0 : i32
    %c0_i32_0 = arith.constant 0 : i32
    return %arg0, %c0_i32 : i32, i32
  }
}

</mosaic_0001>

<llo_original>
// kernel: tpu_custom_call.1
$region0: #{tpu_custom_call.1}
  #allocation0 [shape = 'u32[]', space=smem, size = 0x4, offset = 0x4, fixed_abs, tag = 'smem constant byte address 0x4 - core index']
  #allocation1 [shape = 'u32[72,128]{1,0:T(1,128)}', space=vmem, size = 0x9000, scoped, tag = 'internal scratch']
  %s0 = inlined_call_operand.vmem [shape: f32[32,4], index: 0, kind: input, shape index: {}]
  %s1 = inlined_call_operand.vmem [shape: f32[32,2], index: 1, kind: input, shape index: {}]
  %s2 = inlined_call_operand.vmem [shape: f32[7,32], index: 2, kind: input, shape index: {}]
  %s3 = inlined_call_operand.vmem [shape: f32[33,16], index: 3, kind: input, shape index: {}]
  %s4 = inlined_call_operand.vmem [shape: f32[32,16], index: 4, kind: output, shape index: {}]
  %s5 = sld [smem:[#allocation0]]
  $region49: #{tpu_custom_call.1} parent=0
    _
  %s7 = ssub.s32 1, %s5
  %s8 = scalar_select 0, %s7, %s5
  loop: start=0, step=1, limit=6
  $region2: #{tpu_custom_call.1} parent=0 // loop_pre_header
    _
  $region3: #{tpu_custom_call.1} parent=0 // loop_header
    %s10 = sphi 0, %s14
    %p11 = scmp.ge.s32.totalorder %s10, 6
    %s20 = sphi 0, %s22
    %s23 = sphi 0, %s20
    %s24 = sphi 0, %s23
    %s40 = sphi 0, %s24
    %s46 = sphi 0, %s48
    %s49 = sphi 0, %s46
    %s50 = sphi 0, %s49
    %s66 = sphi 0, %s50
    %s70 = sphi 0, %s70
    %s72 = sphi 0, %s70
    %s73 = sphi 0, %s72
    %s87 = sphi 0, %s73
    %s91 = sphi 0, %s91
    %s93 = sphi 0, %s91
    %s94 = sphi 0, %s93
    %s108 = sphi 0, %s94
    %s114 = sphi 0, %s116
    %s117 = sphi 0, %s114
    %s118 = sphi 0, %s117
    %s134 = sphi 0, %s118
  $region4: #{tpu_custom_call.1} parent=0 // loop_header_branch
    %13 = sbr.rel (%p11) target = $region8
  $region5: #{tpu_custom_call.1} parent=0 // loop_body
    %s15 = ssub.s32 %s10, 1
    %s16 = ssub.s32 %s10, 2
    %s17 = sadd.s32 %s10, 1
    %s18 = ssub.s32 %s10, %s17
    %p19 = scmp.eq.s32.totalorder %s18, 0
    %s21 = sadd.s32 %s20, 1
    %s22 = scalar_select %p19, %s20, %s21
    %p25 = pneg %p19
    %p26 = scmp.eq.s32.totalorder %s10, 3
    %p27 = por %p25, %p26
    %p28 = scmp.ne.s32.totalorder %s20, %s23
    %p29 = scmp.eq.s32.totalorder %s10, 0
    %p30 = por %p28, %p29
    %p31 = scmp.ne.s32.totalorder %s20, %s23
    %p32 = scmp.eq.s32.totalorder %s15, 3
    %p33 = por %p31, %p32
    %p34 = scmp.ne.s32.totalorder %s23, %s24
    %p35 = scmp.eq.s32.totalorder %s15, 0
    %p36 = por %p34, %p35
    %p37 = scmp.ne.s32.totalorder %s23, %s24
    %p38 = scmp.eq.s32.totalorder %s16, 3
    %p39 = por %p37, %p38
    %p41 = scmp.ne.s32.totalorder %s24, %s40
    %p42 = scmp.eq.s32.totalorder %s16, 0
    %p43 = por %p41, %p42
    %s44 = ssub.s32 %s10, %s17
    %p45 = scmp.eq.s32.totalorder %s44, 0
    %s47 = sadd.s32 %s46, 1
    %s48 = scalar_select %p45, %s46, %s47
    %p51 = pneg %p45
    %p52 = scmp.eq.s32.totalorder %s10, 3
    %p53 = por %p51, %p52
    %p54 = scmp.ne.s32.totalorder %s46, %s49
    %p55 = scmp.eq.s32.totalorder %s10, 0
    %p56 = por %p54, %p55
    %p57 = scmp.ne.s32.totalorder %s46, %s49
    %p58 = scmp.eq.s32.totalorder %s15, 3
    %p59 = por %p57, %p58
    %p60 = scmp.ne.s32.totalorder %s49, %s50
    %p61 = scmp.eq.s32.totalorder %s15, 0
    %p62 = por %p60, %p61
    %p63 = scmp.ne.s32.totalorder %s49, %s50
    %p64 = scmp.eq.s32.totalorder %s16, 3
    %p65 = por %p63, %p64
    %p67 = scmp.ne.s32.totalorder %s50, %s66
    %p68 = scmp.eq.s32.totalorder %s16, 0
    %p69 = por %p67, %p68
    %s71 = sadd.s32 %s70, 1
    %p74 = scmp.eq.s32.totalorder %s10, 3
    %p75 = scmp.ne.s32.totalorder %s70, %s72
    %p76 = scmp.eq.s32.totalorder %s10, 0
    %p77 = por %p75, %p76
    %p78 = scmp.ne.s32.totalorder %s70, %s72
    %p79 = scmp.eq.s32.totalorder %s15, 3
    %p80 = por %p78, %p79
    %p81 = scmp.ne.s32.totalorder %s72, %s73
    %p82 = scmp.eq.s32.totalorder %s15, 0
    %p83 = por %p81, %p82
    %p84 = scmp.ne.s32.totalorder %s72, %s73
    %p85 = scmp.eq.s32.totalorder %s16, 3
    %p86 = por %p84, %p85
    %p88 = scmp.ne.s32.totalorder %s73, %s87
    %p89 = scmp.eq.s32.totalorder %s16, 0
    %p90 = por %p88, %p89
    %s92 = sadd.s32 %s91, 1
    %p95 = scmp.eq.s32.totalorder %s10, 3
    %p96 = scmp.ne.s32.totalorder %s91, %s93
    %p97 = scmp.eq.s32.totalorder %s10, 0
    %p98 = por %p96, %p97
    %p99 = scmp.ne.s32.totalorder %s91, %s93
    %p100 = scmp.eq.s32.totalorder %s15, 3
    %p101 = por %p99, %p100
    %p102 = scmp.ne.s32.totalorder %s93, %s94
    %p103 = scmp.eq.s32.totalorder %s15, 0
    %p104 = por %p102, %p103
    %p105 = scmp.ne.s32.totalorder %s93, %s94
    %p106 = scmp.eq.s32.totalorder %s16, 3
    %p107 = por %p105, %p106
    %p109 = scmp.ne.s32.totalorder %s94, %s108
    %p110 = scmp.eq.s32.totalorder %s16, 0
    %p111 = por %p109, %p110
    %s112 = ssub.s32 %s10, %s17
    %p113 = scmp.eq.s32.totalorder %s112, 0
    %s115 = sadd.s32 %s114, 1
    %s116 = scalar_select %p113, %s114, %s115
    %p119 = pneg %p113
    %p120 = scmp.eq.s32.totalorder %s10, 3
    %p121 = por %p119, %p120
    %p122 = scmp.ne.s32.totalorder %s114, %s117
    %p123 = scmp.eq.s32.totalorder %s10, 0
    %p124 = por %p122, %p123
    %p125 = scmp.ne.s32.totalorder %s114, %s117
    %p126 = scmp.eq.s32.totalorder %s15, 3
    %p127 = por %p125, %p126
    %p128 = scmp.ne.s32.totalorder %s117, %s118
    %p129 = scmp.eq.s32.totalorder %s15, 0
    %p130 = por %p128, %p129
    %p131 = scmp.ne.s32.totalorder %s117, %s118
    %p132 = scmp.eq.s32.totalorder %s16, 3
    %p133 = por %p131, %p132
    %p135 = scmp.ne.s32.totalorder %s118, %s134
    %p136 = scmp.eq.s32.totalorder %s16, 0
    %p137 = por %p135, %p136
    %p138 = scmp.le.s32.totalorder 1, %s10
    %p139 = scmp.lt.s32.totalorder %s10, 5
    %p140 = pnand %p138, %p139
    %p141 = pneg %p140
    // Predicated region
    $region9: #{tpu_custom_call.1} parent=5 // pred_check
      _
    $region10: #{tpu_custom_call.1} parent=5 // pred_check_branch
      %143 = sbr.rel (%p140) target = $region12
    $region11: #{tpu_custom_call.1} parent=5 // pred_region
      %s144 = ssub.s32 %s10, 1
      // Predicated region
      $region13: #{tpu_custom_call.1} parent=11 // pred_check
        %p145 = pneg %p83
      $region14: #{tpu_custom_call.1} parent=11 // pred_check_branch
        %147 = sbr.rel (%p145) target = $region16
      $region15: #{tpu_custom_call.1} parent=11 // pred_region
        _
      $region16: #{tpu_custom_call.1} parent=11 // pred_fallthru
        _
      // Predicated region
      $region17: #{tpu_custom_call.1} parent=11 // pred_check
        %p148 = pneg %p104
      $region18: #{tpu_custom_call.1} parent=11 // pred_check_branch
        %150 = sbr.rel (%p148) target = $region20
      $region19: #{tpu_custom_call.1} parent=11 // pred_region
        _
      $region20: #{tpu_custom_call.1} parent=11 // pred_fallthru
        _
    $region12: #{tpu_custom_call.1} parent=5 // pred_fallthru
      _
    %p151 = scmp.lt.s32.totalorder %s10, 4
    // Predicated region
    $region21: #{tpu_custom_call.1} parent=5 // pred_check
      %p152 = pneg %p151
    $region22: #{tpu_custom_call.1} parent=5 // pred_check_branch
      %154 = sbr.rel (%p152) target = $region24
    $region23: #{tpu_custom_call.1} parent=5 // pred_region
      // Predicated region
      $region25: #{tpu_custom_call.1} parent=23 // pred_check
        %p155 = pneg %p30
      $region26: #{tpu_custom_call.1} parent=23 // pred_check_branch
        %157 = sbr.rel (%p155) target = $region28
      $region27: #{tpu_custom_call.1} parent=23 // pred_region
        %p158 = scmp.lt.s32.totalorder %s10, 3
        %s159 = scalar_select %p158, %s10, 3
        %s160 = smul.addr %s159, 8
        %s161 = scalar_lea.vmem %s0, %s160
      $region28: #{tpu_custom_call.1} parent=23 // pred_fallthru
        _
      // Predicated region
      $region29: #{tpu_custom_call.1} parent=23 // pred_check
        %p162 = pneg %p56
      $region30: #{tpu_custom_call.1} parent=23 // pred_check_branch
        %164 = sbr.rel (%p162) target = $region32
      $region31: #{tpu_custom_call.1} parent=23 // pred_region
        %p165 = scmp.lt.s32.totalorder %s10, 3
        %s166 = scalar_select %p165, %s10, 3
        %s167 = smul.addr %s166, 8
        %s168 = scalar_lea.vmem %s1, %s167
      $region32: #{tpu_custom_call.1} parent=23 // pred_fallthru
        _
    $region24: #{tpu_custom_call.1} parent=5 // pred_fallthru
      _
    %p169 = scmp.le.s32.totalorder 1, %s10
    %p170 = scmp.lt.s32.totalorder %s10, 5
    %p171 = pnand %p169, %p170
    %p172 = pneg %p171
    // Predicated region
    $region33: #{tpu_custom_call.1} parent=5 // pred_check
      _
    $region34: #{tpu_custom_call.1} parent=5 // pred_check_branch
      %174 = sbr.rel (%p171) target = $region36
    $region35: #{tpu_custom_call.1} parent=5 // pred_region
      %s175 = ssub.s32 %s10, 1
      %p176 = scmp.lt.s32.totalorder %s15, 3
      %s177 = scalar_select %p176, %s15, 3
      %s178 = smul.addr %s177, 8
      %s179 = scalar_lea.vmem %s0, %s178
      %p180 = pneg %p36
      %p181 = pneg %p33
      %p182 = scmp.lt.s32.totalorder %s15, 3
      %s183 = scalar_select %p182, %s15, 3
      %s184 = smul.addr %s183, 8
      %s185 = scalar_lea.vmem %s1, %s184
      %p186 = pneg %p62
      %p187 = pneg %p59
      %p188 = pneg %p83
      %p189 = pneg %p80
      %p190 = pneg %p104
      %p191 = pneg %p101
      %p192 = pneg %p130
      %p193 = pneg %p127
      %p194 = scmp.lt.s32.totalorder %s15, 3
      %s195 = scalar_select %p194, %s15, 3
      %s196 = smul.addr %s195, 8
      %s197 = scalar_lea.vmem %s4, %s196
      %p198 = scmp.lt.s32.totalorder %s15, 3
      %s199 = scalar_select %p198, %s15, 3
      %s200 = smul.addr %s199, 8
      %s201 = scalar_lea.vmem %s0, %s200
      %p202 = scmp.lt.s32.totalorder %s15, 3
      %s203 = scalar_select %p202, %s15, 3
      %s204 = smul.addr %s203, 8
      %s205 = scalar_lea.vmem %s1, %s204
      %p206 = scmp.lt.s32.totalorder %s15, 3
      %s207 = scalar_select %p206, %s15, 3
      %s208 = smul.addr %s207, 8
      %s209 = scalar_lea.vmem %s4, %s208
      %v210 = vld [vmem:[%s201] sm:$0xff]
      %v211 = vld [vmem:[%s205] sm:$0xff]
      %v212 = vld [vmem:[%s2] sm:$0xf]
      %v213 = vld [vmem:[%s2 + $0x4] sm:$0x3]
      %v214 = vld [vmem:[%s2 + $0x6] sm:$0x1]
      %v215 = vld [vmem:[%s3] sm:$0xff]
      %v216 = vld [vmem:[%s3 + $0x8] sm:$0xff]
      %v217 = vld [vmem:[%s3 + $0x10] sm:$0xff]
      %v218 = vld [vmem:[%s3 + $0x18] sm:$0xff]
      %v219 = vld [vmem:[%s3 + $0x20] sm:$0x1]
      %vm220 = vcmask 15360
      %v222 = vsel %vm220, %v211, 0
      %vm224 = vcmask 1041408
      %v226 = vsel %vm224, %v213, 0
      %228 = vmatpush.msra.mxu0 0.0
      %229 = vmatpush.msra.mxu0 0.0
      %230 = vmatpush.msra.mxu0 0.0
      %231 = vmatpush.msra.mxu0 0.0
      %232 = vmatpush.msra.mxu0 0.0
      %233 = vmatpush.msra.mxu0 0.0
      %234 = vmatpush.msra.mxu0 0.0
      %235 = vmatpush.msra.mxu0 0.0
      %236 = vmatpush.msra.mxu0 0.0
      %237 = vmatpush.msra.mxu0 0.0
      %238 = vmatpush.msra.mxu0 0.0
      %239 = vmatpush.msra.mxu0 0.0
      %240 = vmatpush.msra.mxu0 0.0
      %241 = vmatpush.msra.mxu0 0.0
      %242 = vmatpush.msra.mxu0 0.0
      %243 = vmatpush.msra.mxu0 %v226
      %244 = vmatmul.f32.gmra.mxu0 %v222
      %v245 = vpop.f32.mrf.mxu0
      %v246 = vadd.f32 0.0, %v245
      %247 = vdwg.mxu0
      %vm248 = vcmask 31744
      %v250 = vsel %vm248, %v210, 0
      %vm252 = vcmask 1043456
      %v254 = vsel %vm252, %v212, 0
      %256 = vmatpush.msra.mxu0 0.0
      %257 = vmatpush.msra.mxu0 0.0
      %258 = vmatpush.msra.mxu0 0.0
      %259 = vmatpush.msra.mxu0 0.0
      %260 = vmatpush.msra.mxu0 0.0
      %261 = vmatpush.msra.mxu0 0.0
      %262 = vmatpush.msra.mxu0 0.0
      %263 = vmatpush.msra.mxu0 0.0
      %264 = vmatpush.msra.mxu0 0.0
      %265 = vmatpush.msra.mxu0 0.0
      %266 = vmatpush.msra.mxu0 0.0
      %267 = vmatpush.msra.mxu0 0.0
      %268 = vmatpush.msra.mxu0 0.0
      %269 = vmatpush.msra.mxu0 0.0
      %270 = vmatpush.msra.mxu0 0.0
      %271 = vmatpush.msra.mxu0 %v254
      %272 = vmatmul.f32.gmra.mxu0 %v250
      %v273 = vpop.f32.mrf.mxu0
      %v274 = vadd.f32 %v246, %v273
      %275 = vdwg.mxu0
      %v276 = vperm.slane %v214, 0
      %v277 = vadd.f32 %v274, %v276
      %v278 = vmax.f32 %v277, 0.0
      %v279 = vperm.slane %v219, 0
      %vm280 = vcmask 261120
      %v282 = vsel %vm280, %v278, 0
      %284 = vmatpush.msra.mxu0 0.0
      %285 = vmatpush.msra.mxu0 0.0
      %286 = vmatpush.msra.mxu0 0.0
      %287 = vmatpush.msra.mxu0 0.0
      %288 = vmatpush.msra.mxu0 0.0
      %289 = vmatpush.msra.mxu0 0.0
      %290 = vmatpush.msra.mxu0 0.0
      %291 = vmatpush.msra.mxu0 0.0
      %292 = vmatpush.msra.mxu0 0.0
      %293 = vmatpush.msra.mxu0 0.0
      %294 = vmatpush.msra.mxu0 0.0
      %295 = vmatpush.msra.mxu0 0.0
      %296 = vmatpush.msra.mxu0 %v218
      %297 = vmatpush.msra.mxu0 %v217
      %298 = vmatpush.msra.mxu0 %v216
      %299 = vmatpush.msra.mxu0 %v215
      %300 = vmatmul.f32.gmra.mxu0 %v282
      %v301 = vpop.f32.mrf.mxu0
      %v302 = vadd.f32 %v279, %v301
      %303 = vdwg.mxu0
      %vm304 = vcmask 130048
      %305 = vst.msk [vmem:[%s209] sm:$0xff] %vm304, %v302
      %p306 = scmp.lt.s32.totalorder %s15, 3
      %s307 = scalar_select %p306, %s15, 3
      %s308 = smul.addr %s307, 8
      %s309 = scalar_lea.vmem %s4, %s308
      // Predicated region
      $region37: #{tpu_custom_call.1} parent=35 // pred_check
        %p310 = pneg %p127
      $region38: #{tpu_custom_call.1} parent=35 // pred_check_branch
        %312 = sbr.rel (%p310) target = $region40
      $region39: #{tpu_custom_call.1} parent=35 // pred_region
        _
      $region40: #{tpu_custom_call.1} parent=35 // pred_fallthru
        _
    $region36: #{tpu_custom_call.1} parent=5 // pred_fallthru
      _
    %p313 = scmp.le.s32.totalorder 2, %s10
    // Predicated region
    $region41: #{tpu_custom_call.1} parent=5 // pred_check
      %p314 = pneg %p313
    $region42: #{tpu_custom_call.1} parent=5 // pred_check_branch
      %316 = sbr.rel (%p314) target = $region44
    $region43: #{tpu_custom_call.1} parent=5 // pred_region
      %s317 = ssub.s32 %s10, 2
      // Predicated region
      $region45: #{tpu_custom_call.1} parent=43 // pred_check
        %p318 = pneg %p133
      $region46: #{tpu_custom_call.1} parent=43 // pred_check_branch
        %320 = sbr.rel (%p318) target = $region48
      $region47: #{tpu_custom_call.1} parent=43 // pred_region
        %p321 = scmp.lt.s32.totalorder %s16, 3
        %s322 = scalar_select %p321, %s16, 3
        %s323 = smul.addr %s322, 8
        %s324 = scalar_lea.vmem %s4, %s323
      $region48: #{tpu_custom_call.1} parent=43 // pred_fallthru
        _
    $region44: #{tpu_custom_call.1} parent=5 // pred_fallthru
      _
  $region6: #{tpu_custom_call.1} parent=0 // loop_footer
    %s14 = sadd.s32 1, %s10
  $region7: #{tpu_custom_call.1} parent=0 // loop_footer_branch
    %9 = sbr.rel target = $region3
  $region8: #{tpu_custom_call.1} parent=0 // loop_exit
    _

</llo_original>
